<compile_context>
chip_gen: v7x
topology: tpu7x:2x2x1
jax: 0.10.0
libtpu: 0.0.40
codegen_flags: <defaults>
</compile_context>

<pallas_src>
from functools import lru_cache, partial

import jax
import jax.numpy as jnp
from jax.experimental import pallas as pl
from jax.experimental.pallas import tpu as pltpu


# Default timesteps per block: 8192 rows x 32 classes x 4 B = 1 MiB of real
# HBM data per block (lane-padded in VMEM), double-buffered input + output
# ~= 16 MiB -> fits the explicit 32 MiB scoped VMEM limit on every generation
# (v7x physical VMEM is 64 MiB).
_MAX_TILE_T = 8192
_VMEM_LIMIT_BYTES = 32 * 1024 * 1024


def _round_up(x, m):
    return ((x + m - 1) // m) * m


def _argmax_kernel(em_ref, idx_ref, *, num_classes):
    """Per-timestep argmax over classes for one time tile.

    em_ref:  (tile_t, C) float -- time on sublanes, classes on lanes
    idx_ref: (tile_t, 1) int32 -- argmax class index (first occurrence wins)
    """
    em = em_ref[...]                                          # (tile_t, C)

    # max over the class (lane) axis, then first-occurrence tie-break
    # (matches torch.argmax): smallest class index attaining the max.
    m = jnp.max(em, axis=1, keepdims=True)                    # (tile_t, 1)
    col = jax.lax.broadcasted_iota(jnp.int32, em.shape, 1)    # class indices
    cand = jnp.where(em == m, col, jnp.int32(num_classes))
    idx = jnp.min(cand, axis=1, keepdims=True)                # (tile_t, 1)

    # NaN rows (em == m is all-False) would yield num_classes; clamp so the
    # host label lookup can never go out of range.  Garbage rows of a partial
    # boundary block land at t >= T and are clipped on writeback anyway.
    idx_ref[...] = jnp.minimum(idx, jnp.int32(num_classes - 1))


@lru_cache(maxsize=None)
def _build_decode_fn(T, C, blank, dtype_name, max_tile_t):
    """Build (and cache) a jitted callable for fixed (T, C, blank, tile)."""
    tile_t = max(8, min(int(max_tile_t), _round_up(T, 8)))
    tile_t = _round_up(tile_t, 8)          # sublane alignment for the block
    grid = (pl.cdiv(T, tile_t),)
    itemsize = jnp.dtype(dtype_name).itemsize

    call = pl.pallas_call(
        partial(_argmax_kernel, num_classes=C),
        out_shape=jax.ShapeDtypeStruct((T, 1), jnp.int32),
        grid=grid,
        in_specs=[pl.BlockSpec((tile_t, C), lambda i: (i, 0))],
        out_specs=pl.BlockSpec((tile_t, 1), lambda i: (i, 0)),
        compiler_params=pltpu.CompilerParams(
            # Tiles are independent (the dedup runs outside the kernel), so
            # the time axis can be sharded across both TensorCores on v7x.
            dimension_semantics=("parallel",),
            vmem_limit_bytes=_VMEM_LIMIT_BYTES,
        ),
        # Cheap, purely mem-bound custom call -- tell the XLA scheduler so it
        # overlaps it properly when fused into a larger jit.
        cost_estimate=pl.CostEstimate(
            flops=3 * T * C,
            transcendentals=0,
            bytes_accessed=T * C * itemsize + T * 4,
        ),
    )

    def fn(emission):
        ids = call(emission)[:, 0]                   # (T,) int32 argmax
        # unique_consecutive (keep run starts) + drop blanks, on the tiny
        # (T,) int32 vector; -1 means "dropped".
        prev = jnp.concatenate([jnp.full((1,), -1, jnp.int32), ids[:-1]])
        keep = jnp.logical_and(ids != prev, ids != jnp.int32(blank))
        return jnp.where(keep, ids, jnp.int32(-1))

    return jax.jit(fn)


def greedy_ctc_decode_ids(emission, blank=0, tile_t=None):
    """Returns a length-T int32 vector: argmax class idx where that timestep
    survives unique_consecutive + blank removal, else -1."""
    T, C = emission.shape
    fn = _build_decode_fn(int(T), int(C), int(blank), str(emission.dtype),
                          _MAX_TILE_T if tile_t is None else int(tile_t))
    return fn(emission)


class GreedyCTCDecoder:
    """JAX/Pallas port of the PyTorch GreedyCTCDecoder module."""

    def __init__(self, labels, blank=0):
        self.labels = labels
        self.blank = blank

    def __call__(self, emission):
        packed = greedy_ctc_decode_ids(emission, blank=self.blank)
        packed = jax.device_get(jax.block_until_ready(packed))
        # host-side glue: label lookup + string join (dynamic output length)
        return ''.join(self.labels[int(i)] for i in packed if i >= 0)


def _reference_decode(emission_np, labels, blank=0):
    # pure-python reference mirroring the torch semantics:
    # argmax -> unique_consecutive -> drop blank -> join labels
    ind = emission_np.argmax(-1)
    out = []
    prev = None
    for i in ind:
        if prev is None or i != prev:
            if i != blank:
                out.append(labels[int(i)])
        prev = i
    return ''.join(out)


if __name__ == "__main__":
    import numpy as np

    # 32 labels; label 0 ('-') is the CTC blank
    labels = list("-abcdefghijklmnopqrstuvwxyz' .,?")
    assert len(labels) == 32

    key = jax.random.PRNGKey(0)
    k1, k2, k3 = jax.random.split(key, 3)

    decoder = GreedyCTCDecoder(labels, blank=0)

    # Test 1: small module-consistent shape (T=16, C=32), single tile.
    em1 = jax.random.normal(k1, (16, 32), dtype=jnp.float32)
    dec1 = decoder(em1)
    ref1 = _reference_decode(np.asarray(em1), labels, blank=0)
    assert dec1 == ref1, f"mismatch: kernel={dec1!r} ref={ref1!r}"

    # Test 2: multi-tile path with a partial boundary block
    # (T=500, tile_t=128 -> grid of 4, last block covers rows 384..512).
    em2 = jax.random.normal(k2, (500, 32), dtype=jnp.float32)
    ids2 = jax.block_until_ready(greedy_ctc_decode_ids(em2, blank=0, tile_t=128))
    dec2 = ''.join(labels[int(i)] for i in np.asarray(ids2) if i >= 0)
    ref2 = _reference_decode(np.asarray(em2), labels, blank=0)
    assert dec2 == ref2, f"multi-tile mismatch: kernel={dec2!r} ref={ref2!r}"

    # Test 3: bf16 emissions accepted without any wrapper upcast.
    em3 = jax.random.normal(k3, (512, 32), dtype=jnp.bfloat16)
    dec3 = decoder(em3)
    ref3 = _reference_decode(np.asarray(em3.astype(jnp.float32)), labels, blank=0)
    assert dec3 == ref3, f"bf16 mismatch: kernel={dec3!r} ref={ref3!r}"

    # Test 4: NaN rows must not crash the host label lookup (idx stays in range).
    em4 = np.asarray(em1).copy()
    em4[3, :] = np.nan
    dec4 = decoder(jnp.asarray(em4))
    assert isinstance(dec4, str)

    print("KERNEL_OK")
</pallas_src>

<mosaic_0001>
module attributes {stable_mosaic.version = 11 : i64} {
  func.func @_argmax_kernel(%arg0: i32, %arg1: memref<16x32xf32, #tpu.memory_space<vmem>>, %arg2: memref<16x1xi32, #tpu.memory_space<vmem>>) attributes {dimension_semantics = [#tpu.dimension_semantics<parallel>], iteration_bounds = array<i64: 1>, scalar_prefetch = 0 : i64, scratch_operands = 0 : i64, tpu.core_type = #tpu.core_type<tc>, window_params = [{transform_indices = @transform_0, window_bounds = array<i64: 16, 32>}, {transform_indices = @transform_1, window_bounds = array<i64: 16, 1>}]} {
    %c0 = arith.constant 0 : index
    %c0_0 = arith.constant 0 : index
    %0 = vector.load %arg1[%c0, %c0_0] : memref<16x32xf32, #tpu.memory_space<vmem>>, vector<16x32xf32>
    %cst = arith.constant dense<0xFF800000> : vector<16xf32>
    %1 = vector.multi_reduction <maximumf>, %0, %cst [1] : vector<16x32xf32> to vector<16xf32>
    %2 = vector.shape_cast %1 : vector<16xf32> to vector<16x1xf32>
    %3 = tpu.iota {dimensions = array<i32: 1>} : vector<16x32xi32>
    %4 = vector.broadcast %2 : vector<16x1xf32> to vector<16x32xf32>
    %5 = arith.cmpf oeq, %0, %4 : vector<16x32xf32>
    %c32_i32 = arith.constant 32 : i32
    %6 = vector.broadcast %c32_i32 : i32 to vector<16x32xi32>
    %7 = arith.select %5, %3, %6 : vector<16x32xi1>, vector<16x32xi32>
    %cst_1 = arith.constant dense<2147483647> : vector<16xi32>
    %8 = vector.multi_reduction <minsi>, %7, %cst_1 [1] : vector<16x32xi32> to vector<16xi32>
    %9 = vector.shape_cast %8 : vector<16xi32> to vector<16x1xi32>
    %c31_i32 = arith.constant 31 : i32
    %10 = vector.broadcast %c31_i32 : i32 to vector<16x1xi32>
    %11 = arith.minsi %9, %10 : vector<16x1xi32>
    %c0_2 = arith.constant 0 : index
    %c0_3 = arith.constant 0 : index
    %12 = vector.load %arg2[%c0_2, %c0_3] : memref<16x1xi32, #tpu.memory_space<vmem>>, vector<16x1xi32>
    tpu.vector_store %arg2[%c0_2, %c0_3], %11 {strides = array<i32>} : memref<16x1xi32, #tpu.memory_space<vmem>>, vector<16x1xi32>,
    return
  }
  func.func @transform_0(%arg0: i32) -> (i32, i32) {
    %c0_i32 = arith.constant 0 : i32
    %c0_i32_0 = arith.constant 0 : i32
    return %arg0, %c0_i32 : i32, i32
  }
  func.func @transform_1(%arg0: i32) -> (i32, i32) {
    %c0_i32 = arith.constant 0 : i32
    %c0_i32_0 = arith.constant 0 : i32
    return %arg0, %c0_i32 : i32, i32
  }
}

</mosaic_0001>

<llo_original>
// kernel: fn.1
$region0: #{fn.1}
  #allocation0 [shape = 'u32[]', space=smem, size = 0x4, offset = 0x4, fixed_abs, tag = 'smem constant byte address 0x4 - core index']
  #allocation1 [shape = 'u32[144,128]{1,0:T(1,128)}', space=vmem, size = 0x12000, scoped, tag = 'internal scratch']
  %s0 = inlined_call_operand.hbm [shape: f32[16,32], index: 0, kind: input, shape index: {}]
  %s1 = inlined_call_operand.vmem [shape: s32[16,1], index: 1, kind: output, shape index: {}]
  %s2 = sld [smem:[#allocation0]]
  $region18: #{fn.1} parent=0
    _
  %s4 = ssub.s32 1, %s2
  %s5 = scalar_select 0, %s4, %s2
  $region1: #{fn.1} parent=0
    #allocation2 [shape = 'u8[8192]{0}', space=vmem, size = 0x2000, scoped, tag = 'input window, operand 0, single buffered']
    #allocation3 [shape = 's32[1]{0}', space=sflag, size = 0x4, scoped, tag = 'scoped memory for fn.1']
    %6 = vsyncpa [#allocation3], 0
    // Predicated region
    $region2: #{fn.1} parent=1 // pred_check
      _
    $region3: #{fn.1} parent=1 // pred_check_branch
      %8 = sbr.rel (0) target = $region5
    $region4: #{fn.1} parent=1 // pred_region
      %s10 = ssub.s32 256, 256
      %11 = vsyncadd [#allocation3], %s10
      %s12 = sshll.u32 [#allocation2], 4
      %s13 = int_to_ptr.vmem [resolvable:$true] %s12
      %18 = dma.hbm_to_vmem [thread:$0]  %s0, 256, %s13, [#allocation3], 128, 128, 8
    $region5: #{fn.1} parent=1 // pred_fallthru
      _
    // Predicated region
    $region6: #{fn.1} parent=1 // pred_check
      _
    $region7: #{fn.1} parent=1 // pred_check_branch
      %20 = sbr.rel (0) target = $region9
    $region8: #{fn.1} parent=1 // pred_region
      %21 = dma.done [#allocation3], 256
    $region9: #{fn.1} parent=1 // pred_fallthru
      _
    %v22 = vld [vmem:[#allocation2] sm:$0xff]
    %v23 = vld [vmem:[#allocation2 + $0x8] sm:$0xff]
    %vm24 = vcmask 261120
    %v25 = vsel %vm24, %v22, -inf
    %26 = vmax.xlane.f32.xlu0 %v25
    %v27 = vpop.xlane.xlu0 %26
    %v28 = vsel %vm24, %v23, -inf
    %29 = vmax.xlane.f32.xlu0 %v28
    %v30 = vpop.xlane.xlu0 %29
    %v31 = vlaneseq
    %v32 = vand.u32 %v31, 127
    %vm33 = vcmp.eq.f32.partialorder %v22, %v27
    %vm34 = vcmp.eq.f32.partialorder %v23, %v30
    %v35 = vsel %vm33, %v32, 32
    %v36 = vsel %vm34, %v32, 32
    %v37 = vsel %vm24, %v35, 2147483647
    %v38 = vand.u32 %v37, 65535
    %v39 = vshra.s32 %v37, 16
    %v40 = vcvt.s32.f32 %v38
    %v41 = vcvt.s32.f32 %v39
    %42 = vmin.xlane.f32.xlu0 %v41
    %v43 = vpop.xlane.xlu0 %42
    %vm44 = vcmp.eq.f32.partialorder %v41, %v43
    %v45 = vsel %vm44, %v40, inf
    %46 = vmin.xlane.f32.xlu0 %v45
    %v47 = vpop.xlane.xlu0 %46
    %v48 = vcvt.f32.s32 %v47
    %v49 = vcvt.f32.s32 %v43
    %v50 = vshll.u32 %v49, 16
    %v51 = vadd.s32 %v50, %v48
    %v52 = vsel %vm24, %v36, 2147483647
    %v53 = vand.u32 %v52, 65535
    %v54 = vshra.s32 %v52, 16
    %v55 = vcvt.s32.f32 %v53
    %v56 = vcvt.s32.f32 %v54
    %57 = vmin.xlane.f32.xlu0 %v56
    %v58 = vpop.xlane.xlu0 %57
    %vm59 = vcmp.eq.f32.partialorder %v56, %v58
    %v60 = vsel %vm59, %v55, inf
    %61 = vmin.xlane.f32.xlu0 %v60
    %v62 = vpop.xlane.xlu0 %61
    %v63 = vcvt.f32.s32 %v62
    %v64 = vcvt.f32.s32 %v58
    %v65 = vshll.u32 %v64, 16
    %v66 = vadd.s32 %v65, %v63
    %vm67 = vcmp.lt.s32.totalorder %v51, 31
    %v68 = vsel %vm67, %v51, 31
    %vm69 = vcmp.lt.s32.totalorder %v66, 31
    %v70 = vsel %vm69, %v66, 31
    %vm71 = vcmask 7168
    %72 = vst.msk [vmem:[%s1] sm:$0xff] %vm71, %v68
    %73 = vst.msk [vmem:[%s1 + $0x8] sm:$0xff] %vm71, %v70
    // Predicated region
    $region10: #{fn.1} parent=1 // pred_check
      _
    $region11: #{fn.1} parent=1 // pred_check_branch
      %75 = sbr.rel (0) target = $region13
    $region12: #{fn.1} parent=1 // pred_region
      _
    $region13: #{fn.1} parent=1 // pred_fallthru
      _
    // Predicated region
    $region14: #{fn.1} parent=1 // pred_check
      _
    $region15: #{fn.1} parent=1 // pred_check_branch
      %77 = sbr.rel (0) target = $region17
    $region16: #{fn.1} parent=1 // pred_region
      _
    $region17: #{fn.1} parent=1 // pred_fallthru
      _
    %78 = vsyncpa [#allocation3], 1

</llo_original>
